<compile_context>
chip_gen: v6e
topology: v6e:2x2x1
jax: 0.10.0
libtpu: 0.0.40
codegen_flags: <defaults>
</compile_context>

<pallas_src>
import functools

import jax
import jax.numpy as jnp
from jax.experimental import pallas as pl
from jax.experimental.pallas import tpu as pltpu

NEG_INF = -1000000000.0   # same constant as the PyTorch module


# ---------------------------------------------------------------------------
# Fused MLP kernel.
# TODO(synk): nn.Dropout is identity in eval mode (implemented); training-mode
#             stochastic dropout would need pltpu.prng_seed + stateful_bernoulli.
# ---------------------------------------------------------------------------
def _mlp_kernel(x_ref, w1_ref, b1_ref, w2_ref, b2_ref, w3_ref, b3_ref,
                w4_ref, b4_ref, o_ref):
    dot = functools.partial(jnp.dot, preferred_element_type=jnp.float32)
    h = x_ref[...].astype(jnp.float32)
    h = jnp.maximum(dot(h, w1_ref[...]) + b1_ref[...], 0.0)
    h = jnp.maximum(dot(h, w2_ref[...]) + b2_ref[...], 0.0)
    h = jnp.maximum(dot(h, w3_ref[...]) + b3_ref[...], 0.0)
    o_ref[...] = (dot(h, w4_ref[...]) + b4_ref[...]).astype(o_ref.dtype)


def mlp_apply(x, params, *, tb=8):
    """x: (B, Din) f32 -> logits (B, Dout) f32."""
    w1, b1, w2, b2, w3, b3, w4, b4 = params
    b, d_in = x.shape
    d_out = w4.shape[1]
    b_pad = ((b + tb - 1) // tb) * tb
    x_p = jnp.pad(x, ((0, b_pad - b), (0, 0))) if b_pad != b else x

    def full_spec(arr):
        return pl.BlockSpec(arr.shape, lambda i: (0, 0))

    logits = pl.pallas_call(
        _mlp_kernel,
        out_shape=jax.ShapeDtypeStruct((b_pad, d_out), jnp.float32),
        grid_spec=pltpu.PrefetchScalarGridSpec(
            num_scalar_prefetch=0,
            grid=(b_pad // tb,),
            in_specs=[pl.BlockSpec((tb, d_in), lambda i: (i, 0)),
                      full_spec(w1), full_spec(b1),
                      full_spec(w2), full_spec(b2),
                      full_spec(w3), full_spec(b3),
                      full_spec(w4), full_spec(b4)],
            out_specs=pl.BlockSpec((tb, d_out), lambda i: (i, 0)),
        ),
        compiler_params=pltpu.CompilerParams(
            dimension_semantics=("parallel",)),
    )(x_p, w1, b1, w2, b2, w3, b3, w4, b4)
    return logits[:b]


# ---------------------------------------------------------------------------
# FilterLegalMoves kernel (scalar-prefetched move table, single-select apply).
# possible_moves is a dense padded int32 table (B, K) of legal action indices,
# padded with -1 (never matches a valid column index).
# ---------------------------------------------------------------------------
def _make_filter_kernel(n_moves: int, tile_rows: int):
    def kernel(moves_smem, x_ref, o_ref):
        a = x_ref.shape[1]
        col = jax.lax.broadcasted_iota(jnp.int32, (1, a), 1)   # lane index
        base = pl.program_id(0) * (tile_rows * n_moves)
        x = x_ref[...]
        for r in range(tile_rows):
            off = base + r * n_moves
            # Seed with k=0; scalar SMEM reads splat across lanes for free.
            hit = col == moves_smem[off]
            for k in range(1, n_moves):
                hit = hit | (col == moves_smem[off + k])
            xr = x[r:r + 1, :]
            legal = hit & (xr != 0.0)          # exact-zero legal logits -> -1e9
            o_ref[pl.ds(r, 1), :] = jnp.where(legal, xr, NEG_INF).astype(o_ref.dtype)
    return kernel


def filter_legal_moves(x, moves_padded, *, tb=8):
    """x: (B, A) f32 logits; moves_padded: (B, K) int32 legal indices (-1 pad)."""
    b, a = x.shape
    k = moves_padded.shape[1]
    b_pad = ((b + tb - 1) // tb) * tb
    if b_pad != b:
        x = jnp.pad(x, ((0, b_pad - b), (0, 0)))
        moves_padded = jnp.pad(moves_padded, ((0, b_pad - b), (0, 0)),
                               constant_values=-1)
    # Flatten to 1-D for SMEM (2-D SMEM pads to [ceil(R/8)*8, ceil(C/128)*128]).
    moves_flat = moves_padded.astype(jnp.int32).reshape(-1)

    out = pl.pallas_call(
        _make_filter_kernel(k, tb),
        out_shape=jax.ShapeDtypeStruct((b_pad, a), x.dtype),
        grid_spec=pltpu.PrefetchScalarGridSpec(
            num_scalar_prefetch=1,
            grid=(b_pad // tb,),
            in_specs=[pl.BlockSpec((tb, a), lambda i, moves: (i, 0))],
            out_specs=pl.BlockSpec((tb, a), lambda i, moves: (i, 0)),
        ),
        compiler_params=pltpu.CompilerParams(
            dimension_semantics=("parallel",)),
        cost_estimate=pl.CostEstimate(
            flops=2 * b_pad * a * k,
            transcendentals=0,
            bytes_accessed=2 * b_pad * a * 4 + b_pad * k * 4),
    )(moves_flat, x)
    return out[:b]


def mlp_forward(x, params, possible_moves=None, *, tb=8):
    logits = mlp_apply(x, params, tb=tb)
    if possible_moves is not None:
        logits = filter_legal_moves(logits, possible_moves, tb=tb)
    return logits


# ---------------------------------------------------------------------------
# Pure-JAX reference matching the PyTorch forward (eval mode).
# ---------------------------------------------------------------------------
def _reference(x, params, moves_padded):
    w1, b1, w2, b2, w3, b3, w4, b4 = params
    dot = functools.partial(jnp.dot, preferred_element_type=jnp.float32)
    h = jnp.maximum(dot(x, w1) + b1, 0.0)
    h = jnp.maximum(dot(h, w2) + b2, 0.0)
    h = jnp.maximum(dot(h, w3) + b3, 0.0)
    logits = dot(h, w4) + b4
    a = logits.shape[1]
    col = jnp.arange(a, dtype=jnp.int32)[None, None, :]
    hit = (moves_padded[:, :, None] == col).any(axis=1)
    masked = logits * hit.astype(logits.dtype)
    return jnp.where(masked == 0.0, jnp.asarray(NEG_INF, logits.dtype), masked)


if __name__ == "__main__":
    key = jax.random.PRNGKey(0)
    B, D_IN, HIDDEN, D_OUT, K = 2, 32, 32, 128, 8

    k_x, k_w, k_m = jax.random.split(key, 3)

    def init_linear(kk, fan_in, fan_out, std):
        # Scaled normal init stands in for torch orthogonal init (forward
        # semantics do not depend on the init scheme); bias_const = 0.0.
        w = jax.random.normal(kk, (fan_in, fan_out), jnp.float32)
        w = w * (std / jnp.sqrt(jnp.float32(fan_in)))
        bias = jnp.zeros((1, fan_out), jnp.float32)
        return w, bias

    ks = jax.random.split(k_w, 4)
    w1, b1 = init_linear(ks[0], D_IN, HIDDEN, 2.0 ** 0.5)
    w2, b2 = init_linear(ks[1], HIDDEN, HIDDEN * 2, 2.0 ** 0.5)
    w3, b3 = init_linear(ks[2], HIDDEN * 2, HIDDEN, 2.0 ** 0.5)
    w4, b4 = init_linear(ks[3], HIDDEN, D_OUT, 0.01)
    params = (w1, b1, w2, b2, w3, b3, w4, b4)

    x = jax.random.normal(k_x, (B, D_IN), jnp.float32)

    # Deterministic legal-move indices per batch row (no duplicates, -1 pad unused).
    moves = jnp.stack([
        jax.random.permutation(jax.random.fold_in(k_m, b_idx), D_OUT)[:K]
        for b_idx in range(B)
    ]).astype(jnp.int32)                                   # (B, K)

    out = mlp_forward(x, params, moves)
    out = jax.block_until_ready(out)

    ref = _reference(x, params, moves)
    assert out.shape == (B, D_OUT) and out.dtype == jnp.float32
    assert bool(jnp.allclose(out, ref, rtol=1e-3, atol=1e-5)), "mismatch vs reference"

    print("KERNEL_OK")
</pallas_src>

<mosaic_0001>
module attributes {stable_mosaic.version = 11 : i64} {
  func.func @_mlp_kernel(%arg0: i32, %arg1: memref<8x32xf32, #tpu.memory_space<vmem>>, %arg2: memref<32x32xf32, #tpu.memory_space<vmem>>, %arg3: memref<1x32xf32, #tpu.memory_space<vmem>>, %arg4: memref<32x64xf32, #tpu.memory_space<vmem>>, %arg5: memref<1x64xf32, #tpu.memory_space<vmem>>, %arg6: memref<64x32xf32, #tpu.memory_space<vmem>>, %arg7: memref<1x32xf32, #tpu.memory_space<vmem>>, %arg8: memref<32x128xf32, #tpu.memory_space<vmem>>, %arg9: memref<1x128xf32, #tpu.memory_space<vmem>>, %arg10: memref<8x128xf32, #tpu.memory_space<vmem>>) attributes {dimension_semantics = [#tpu.dimension_semantics<parallel>], iteration_bounds = array<i64: 1>, scalar_prefetch = 0 : i64, scratch_operands = 0 : i64, tpu.core_type = #tpu.core_type<tc>, window_params = [{transform_indices = @transform_0, window_bounds = array<i64: 8, 32>}, {pipeline_mode = #tpu.pipeline_mode<synchronous>, transform_indices = @transform_1, window_bounds = array<i64: 32, 32>}, {pipeline_mode = #tpu.pipeline_mode<synchronous>, transform_indices = @transform_2, window_bounds = array<i64: 1, 32>}, {pipeline_mode = #tpu.pipeline_mode<synchronous>, transform_indices = @transform_3, window_bounds = array<i64: 32, 64>}, {pipeline_mode = #tpu.pipeline_mode<synchronous>, transform_indices = @transform_4, window_bounds = array<i64: 1, 64>}, {pipeline_mode = #tpu.pipeline_mode<synchronous>, transform_indices = @transform_5, window_bounds = array<i64: 64, 32>}, {pipeline_mode = #tpu.pipeline_mode<synchronous>, transform_indices = @transform_6, window_bounds = array<i64: 1, 32>}, {pipeline_mode = #tpu.pipeline_mode<synchronous>, transform_indices = @transform_7, window_bounds = array<i64: 32, 128>}, {pipeline_mode = #tpu.pipeline_mode<synchronous>, transform_indices = @transform_8, window_bounds = array<i64: 1, 128>}, {transform_indices = @transform_9, window_bounds = array<i64: 8, 128>}]} {
    %c0 = arith.constant 0 : index
    %c0_0 = arith.constant 0 : index
    %0 = vector.load %arg1[%c0, %c0_0] : memref<8x32xf32, #tpu.memory_space<vmem>>, vector<8x32xf32>
    %c0_1 = arith.constant 0 : index
    %c0_2 = arith.constant 0 : index
    %1 = vector.load %arg2[%c0_1, %c0_2] : memref<32x32xf32, #tpu.memory_space<vmem>>, vector<32x32xf32>
    %cst = arith.constant dense<0.000000e+00> : vector<8x32xf32>
    %2 = tpu.matmul %0, %1, %cst {dimension_numbers = #tpu.dot_dimension_numbers<[1], [0], [0], [1], [0, 0, 1, 1], [], []>} : vector<8x32xf32>, vector<32x32xf32>, vector<8x32xf32> -> vector<8x32xf32>
    %c0_3 = arith.constant 0 : index
    %c0_4 = arith.constant 0 : index
    %3 = vector.load %arg3[%c0_3, %c0_4] : memref<1x32xf32, #tpu.memory_space<vmem>>, vector<1x32xf32>
    %4 = vector.broadcast %3 : vector<1x32xf32> to vector<8x32xf32>
    %5 = arith.addf %2, %4 : vector<8x32xf32>
    %cst_5 = arith.constant 0.000000e+00 : f32
    %6 = vector.broadcast %cst_5 : f32 to vector<8x32xf32>
    %7 = arith.maximumf %5, %6 : vector<8x32xf32>
    %c0_6 = arith.constant 0 : index
    %c0_7 = arith.constant 0 : index
    %8 = vector.load %arg4[%c0_6, %c0_7] : memref<32x64xf32, #tpu.memory_space<vmem>>, vector<32x64xf32>
    %cst_8 = arith.constant dense<0.000000e+00> : vector<8x64xf32>
    %9 = tpu.matmul %7, %8, %cst_8 {dimension_numbers = #tpu.dot_dimension_numbers<[1], [0], [0], [1], [0, 0, 1, 1], [], []>} : vector<8x32xf32>, vector<32x64xf32>, vector<8x64xf32> -> vector<8x64xf32>
    %c0_9 = arith.constant 0 : index
    %c0_10 = arith.constant 0 : index
    %10 = vector.load %arg5[%c0_9, %c0_10] : memref<1x64xf32, #tpu.memory_space<vmem>>, vector<1x64xf32>
    %11 = vector.broadcast %10 : vector<1x64xf32> to vector<8x64xf32>
    %12 = arith.addf %9, %11 : vector<8x64xf32>
    %cst_11 = arith.constant 0.000000e+00 : f32
    %13 = vector.broadcast %cst_11 : f32 to vector<8x64xf32>
    %14 = arith.maximumf %12, %13 : vector<8x64xf32>
    %c0_12 = arith.constant 0 : index
    %c0_13 = arith.constant 0 : index
    %15 = vector.load %arg6[%c0_12, %c0_13] : memref<64x32xf32, #tpu.memory_space<vmem>>, vector<64x32xf32>
    %cst_14 = arith.constant dense<0.000000e+00> : vector<8x32xf32>
    %16 = tpu.matmul %14, %15, %cst_14 {dimension_numbers = #tpu.dot_dimension_numbers<[1], [0], [0], [1], [0, 0, 1, 1], [], []>} : vector<8x64xf32>, vector<64x32xf32>, vector<8x32xf32> -> vector<8x32xf32>
    %c0_15 = arith.constant 0 : index
    %c0_16 = arith.constant 0 : index
    %17 = vector.load %arg7[%c0_15, %c0_16] : memref<1x32xf32, #tpu.memory_space<vmem>>, vector<1x32xf32>
    %18 = vector.broadcast %17 : vector<1x32xf32> to vector<8x32xf32>
    %19 = arith.addf %16, %18 : vector<8x32xf32>
    %cst_17 = arith.constant 0.000000e+00 : f32
    %20 = vector.broadcast %cst_17 : f32 to vector<8x32xf32>
    %21 = arith.maximumf %19, %20 : vector<8x32xf32>
    %c0_18 = arith.constant 0 : index
    %c0_19 = arith.constant 0 : index
    %22 = vector.load %arg8[%c0_18, %c0_19] : memref<32x128xf32, #tpu.memory_space<vmem>>, vector<32x128xf32>
    %cst_20 = arith.constant dense<0.000000e+00> : vector<8x128xf32>
    %23 = tpu.matmul %21, %22, %cst_20 {dimension_numbers = #tpu.dot_dimension_numbers<[1], [0], [0], [1], [0, 0, 1, 1], [], []>} : vector<8x32xf32>, vector<32x128xf32>, vector<8x128xf32> -> vector<8x128xf32>
    %c0_21 = arith.constant 0 : index
    %c0_22 = arith.constant 0 : index
    %24 = vector.load %arg9[%c0_21, %c0_22] : memref<1x128xf32, #tpu.memory_space<vmem>>, vector<1x128xf32>
    %25 = vector.broadcast %24 : vector<1x128xf32> to vector<8x128xf32>
    %26 = arith.addf %23, %25 : vector<8x128xf32>
    %c0_23 = arith.constant 0 : index
    %c0_24 = arith.constant 0 : index
    %27 = vector.load %arg10[%c0_23, %c0_24] : memref<8x128xf32, #tpu.memory_space<vmem>>, vector<8x128xf32>
    tpu.vector_store %arg10[%c0_23, %c0_24], %26 {strides = array<i32>} : memref<8x128xf32, #tpu.memory_space<vmem>>, vector<8x128xf32>,
    return
  }
  func.func @transform_0(%arg0: i32) -> (i32, i32) {
    %c0_i32 = arith.constant 0 : i32
    %c0_i32_0 = arith.constant 0 : i32
    return %arg0, %c0_i32 : i32, i32
  }
  func.func @transform_1(%arg0: i32) -> (i32, i32) {
    %c0_i32 = arith.constant 0 : i32
    %c0_i32_0 = arith.constant 0 : i32
    %c0_i32_1 = arith.constant 0 : i32
    return %c0_i32, %c0_i32_0 : i32, i32
  }
  func.func @transform_2(%arg0: i32) -> (i32, i32) {
    %c0_i32 = arith.constant 0 : i32
    %c0_i32_0 = arith.constant 0 : i32
    %c0_i32_1 = arith.constant 0 : i32
    return %c0_i32, %c0_i32_0 : i32, i32
  }
  func.func @transform_3(%arg0: i32) -> (i32, i32) {
    %c0_i32 = arith.constant 0 : i32
    %c0_i32_0 = arith.constant 0 : i32
    %c0_i32_1 = arith.constant 0 : i32
    return %c0_i32, %c0_i32_0 : i32, i32
  }
  func.func @transform_4(%arg0: i32) -> (i32, i32) {
    %c0_i32 = arith.constant 0 : i32
    %c0_i32_0 = arith.constant 0 : i32
    %c0_i32_1 = arith.constant 0 : i32
    return %c0_i32, %c0_i32_0 : i32, i32
  }
  func.func @transform_5(%arg0: i32) -> (i32, i32) {
    %c0_i32 = arith.constant 0 : i32
    %c0_i32_0 = arith.constant 0 : i32
    %c0_i32_1 = arith.constant 0 : i32
    return %c0_i32, %c0_i32_0 : i32, i32
  }
  func.func @transform_6(%arg0: i32) -> (i32, i32) {
    %c0_i32 = arith.constant 0 : i32
    %c0_i32_0 = arith.constant 0 : i32
    %c0_i32_1 = arith.constant 0 : i32
    return %c0_i32, %c0_i32_0 : i32, i32
  }
  func.func @transform_7(%arg0: i32) -> (i32, i32) {
    %c0_i32 = arith.constant 0 : i32
    %c0_i32_0 = arith.constant 0 : i32
    %c0_i32_1 = arith.constant 0 : i32
    return %c0_i32, %c0_i32_0 : i32, i32
  }
  func.func @transform_8(%arg0: i32) -> (i32, i32) {
    %c0_i32 = arith.constant 0 : i32
    %c0_i32_0 = arith.constant 0 : i32
    %c0_i32_1 = arith.constant 0 : i32
    return %c0_i32, %c0_i32_0 : i32, i32
  }
  func.func @transform_9(%arg0: i32) -> (i32, i32) {
    %c0_i32 = arith.constant 0 : i32
    %c0_i32_0 = arith.constant 0 : i32
    return %arg0, %c0_i32 : i32, i32
  }
}

</mosaic_0001>

<llo_original>
// kernel: tpu_custom_call.1
$region0: #{tpu_custom_call.1}
  #allocation0 [shape = 'u32[]', space=smem, size = 0x4, offset = 0x4, fixed_abs, tag = 'smem constant byte address 0x4 - core index']
  #allocation1 [shape = 'u32[144,128]{1,0:T(1,128)}', space=vmem, size = 0x12000, scoped, tag = 'internal scratch']
  %s0 = inlined_call_operand.hbm [shape: f32[8,32], index: 0, kind: input, shape index: {}]
  %s1 = inlined_call_operand.vmem [shape: f32[32,32], index: 1, kind: input, shape index: {}]
  %s2 = inlined_call_operand.vmem [shape: f32[1,32], index: 2, kind: input, shape index: {}]
  %s3 = inlined_call_operand.vmem [shape: f32[32,64], index: 3, kind: input, shape index: {}]
  %s4 = inlined_call_operand.vmem [shape: f32[1,64], index: 4, kind: input, shape index: {}]
  %s5 = inlined_call_operand.vmem [shape: f32[64,32], index: 5, kind: input, shape index: {}]
  %s6 = inlined_call_operand.vmem [shape: f32[1,32], index: 6, kind: input, shape index: {}]
  %s7 = inlined_call_operand.vmem [shape: f32[32,128], index: 7, kind: input, shape index: {}]
  %s8 = inlined_call_operand.vmem [shape: f32[1,128], index: 8, kind: input, shape index: {}]
  %s9 = inlined_call_operand.hbm [shape: f32[8,128], index: 9, kind: output, shape index: {}]
  %s10 = sld [smem:[#allocation0]]
  $region50: #{tpu_custom_call.1} parent=0
    _
  %s12 = ssub.s32 1, %s10
  %s13 = scalar_select 0, %s12, %s10
  $region1: #{tpu_custom_call.1} parent=0
    #allocation2 [shape = 'u8[4096]{0}', space=vmem, size = 0x1000, scoped, tag = 'input window, operand 0, single buffered']
    #allocation3 [shape = 's32[1]{0}', space=sflag, size = 0x4, scoped, tag = 'scoped memory for tpu_custom_call.1']
    #allocation4 [shape = 's32[1]{0}', space=sflag, size = 0x4, scoped, tag = 'scoped memory for tpu_custom_call.1']
    #allocation5 [shape = 'u8[4096]{0}', space=vmem, size = 0x1000, scoped, tag = 'output window, operand 0, single buffered']
    %14 = vsyncpa [#allocation3], 0
    %15 = vsyncpa [#allocation4], 0
    // Predicated region
    $region2: #{tpu_custom_call.1} parent=1 // pred_check
      _
    $region3: #{tpu_custom_call.1} parent=1 // pred_check_branch
      %17 = sbr.rel (0) target = $region5
    $region4: #{tpu_custom_call.1} parent=1 // pred_region
      %s19 = ssub.s32 128, 128
      %20 = vsyncadd [#allocation3], %s19
      %s22 = sshll.u32 [#allocation2], 4
      %s23 = int_to_ptr.vmem [resolvable:$true] %s22
      %25 = dma.hbm_to_vmem [thread:$0]  %s0, 128, %s23, [#allocation3]
    $region5: #{tpu_custom_call.1} parent=1 // pred_fallthru
      _
    // Predicated region
    $region6: #{tpu_custom_call.1} parent=1 // pred_check
      _
    $region7: #{tpu_custom_call.1} parent=1 // pred_check_branch
      %27 = sbr.rel (0) target = $region9
    $region8: #{tpu_custom_call.1} parent=1 // pred_region
      _
    $region9: #{tpu_custom_call.1} parent=1 // pred_fallthru
      _
    // Predicated region
    $region10: #{tpu_custom_call.1} parent=1 // pred_check
      _
    $region11: #{tpu_custom_call.1} parent=1 // pred_check_branch
      %29 = sbr.rel (0) target = $region13
    $region12: #{tpu_custom_call.1} parent=1 // pred_region
      _
    $region13: #{tpu_custom_call.1} parent=1 // pred_fallthru
      _
    // Predicated region
    $region14: #{tpu_custom_call.1} parent=1 // pred_check
      _
    $region15: #{tpu_custom_call.1} parent=1 // pred_check_branch
      %31 = sbr.rel (0) target = $region17
    $region16: #{tpu_custom_call.1} parent=1 // pred_region
      _
    $region17: #{tpu_custom_call.1} parent=1 // pred_fallthru
      _
    // Predicated region
    $region18: #{tpu_custom_call.1} parent=1 // pred_check
      _
    $region19: #{tpu_custom_call.1} parent=1 // pred_check_branch
      %33 = sbr.rel (0) target = $region21
    $region20: #{tpu_custom_call.1} parent=1 // pred_region
      _
    $region21: #{tpu_custom_call.1} parent=1 // pred_fallthru
      _
    // Predicated region
    $region22: #{tpu_custom_call.1} parent=1 // pred_check
      _
    $region23: #{tpu_custom_call.1} parent=1 // pred_check_branch
      %35 = sbr.rel (0) target = $region25
    $region24: #{tpu_custom_call.1} parent=1 // pred_region
      _
    $region25: #{tpu_custom_call.1} parent=1 // pred_fallthru
      _
    // Predicated region
    $region26: #{tpu_custom_call.1} parent=1 // pred_check
      _
    $region27: #{tpu_custom_call.1} parent=1 // pred_check_branch
      %37 = sbr.rel (0) target = $region29
    $region28: #{tpu_custom_call.1} parent=1 // pred_region
      _
    $region29: #{tpu_custom_call.1} parent=1 // pred_fallthru
      _
    // Predicated region
    $region30: #{tpu_custom_call.1} parent=1 // pred_check
      _
    $region31: #{tpu_custom_call.1} parent=1 // pred_check_branch
      %39 = sbr.rel (0) target = $region33
    $region32: #{tpu_custom_call.1} parent=1 // pred_region
      _
    $region33: #{tpu_custom_call.1} parent=1 // pred_fallthru
      _
    // Predicated region
    $region34: #{tpu_custom_call.1} parent=1 // pred_check
      _
    $region35: #{tpu_custom_call.1} parent=1 // pred_check_branch
      %41 = sbr.rel (0) target = $region37
    $region36: #{tpu_custom_call.1} parent=1 // pred_region
      _
    $region37: #{tpu_custom_call.1} parent=1 // pred_fallthru
      _
    // Predicated region
    $region38: #{tpu_custom_call.1} parent=1 // pred_check
      _
    $region39: #{tpu_custom_call.1} parent=1 // pred_check_branch
      %43 = sbr.rel (0) target = $region41
    $region40: #{tpu_custom_call.1} parent=1 // pred_region
      %44 = dma.done [#allocation3], 128
    $region41: #{tpu_custom_call.1} parent=1 // pred_fallthru
      _
    %v45 = vld [vmem:[#allocation2] sm:$0xff]
    %v46 = vld [vmem:[%s1] sm:$0xff]
    %v47 = vld [vmem:[%s1 + $0x8] sm:$0xff]
    %v48 = vld [vmem:[%s1 + $0x10] sm:$0xff]
    %v49 = vld [vmem:[%s1 + $0x18] sm:$0xff]
    %v50 = vld [vmem:[%s2] sm:$0x1]
    %v52 = vlaneseq
    %v53 = vshrl.u32 %v52, 7
    %v54 = vsub.s32 0, %v53
    %v55 = vrot.slane %v50, %v54
    %vm57 = vcmask 261120
    %v59 = vsel %vm57, %v45, 0
    %61 = vmatprep.subr.mxu0 0.0
    %62 = vmatpush1.msra.mxu0 0.0
    %63 = vmatprep.subr.mxu0 0.0
    %64 = vmatpush1.msra.mxu0 0.0
    %65 = vmatprep.subr.mxu0 0.0
    %66 = vmatpush1.msra.mxu0 0.0
    %67 = vmatprep.subr.mxu0 0.0
    %68 = vmatpush1.msra.mxu0 0.0
    %69 = vmatprep.subr.mxu0 0.0
    %70 = vmatpush1.msra.mxu0 0.0
    %71 = vmatprep.subr.mxu0 0.0
    %72 = vmatpush1.msra.mxu0 0.0
    %73 = vmatprep.subr.mxu0 0.0
    %74 = vmatpush1.msra.mxu0 0.0
    %75 = vmatprep.subr.mxu0 0.0
    %76 = vmatpush1.msra.mxu0 0.0
    %77 = vmatprep.subr.mxu0 0.0
    %78 = vmatpush1.msra.mxu0 0.0
    %79 = vmatprep.subr.mxu0 0.0
    %80 = vmatpush1.msra.mxu0 0.0
    %81 = vmatprep.subr.mxu0 0.0
    %82 = vmatpush1.msra.mxu0 0.0
    %83 = vmatprep.subr.mxu0 0.0
    %84 = vmatpush1.msra.mxu0 0.0
    %85 = vmatprep.subr.mxu0 0.0
    %86 = vmatpush1.msra.mxu0 %v49
    %87 = vmatprep.subr.mxu0 0.0
    %88 = vmatpush1.msra.mxu0 %v48
    %89 = vmatprep.subr.mxu0 0.0
    %90 = vmatpush1.msra.mxu0 %v47
    %91 = vmatprep.subr.mxu0 0.0
    %92 = vmatpush1.msra.mxu0 %v46
    %93 = vmatprep.subr.mxu0 0.0
    %94 = vmatpush2.msra.mxu0 0.0
    %95 = vmatprep.subr.mxu0 0.0
    %96 = vmatpush2.msra.mxu0 0.0
    %97 = vmatprep.subr.mxu0 0.0
    %98 = vmatpush2.msra.mxu0 0.0
    %99 = vmatprep.subr.mxu0 0.0
    %100 = vmatpush2.msra.mxu0 0.0
    %101 = vmatprep.subr.mxu0 0.0
    %102 = vmatpush2.msra.mxu0 0.0
    %103 = vmatprep.subr.mxu0 0.0
    %104 = vmatpush2.msra.mxu0 0.0
    %105 = vmatprep.subr.mxu0 0.0
    %106 = vmatpush2.msra.mxu0 0.0
    %107 = vmatprep.subr.mxu0 0.0
    %108 = vmatpush2.msra.mxu0 0.0
    %109 = vmatprep.subr.mxu0 0.0
    %110 = vmatpush2.msra.mxu0 0.0
    %111 = vmatprep.subr.mxu0 0.0
    %112 = vmatpush2.msra.mxu0 0.0
    %113 = vmatprep.subr.mxu0 0.0
    %114 = vmatpush2.msra.mxu0 0.0
    %115 = vmatprep.subr.mxu0 0.0
    %116 = vmatpush2.msra.mxu0 0.0
    %117 = vmatprep.subr.mxu0 0.0
    %118 = vmatpush2.msra.mxu0 0.0
    %119 = vmatprep.subr.mxu0 0.0
    %120 = vmatpush2.msra.mxu0 0.0
    %121 = vmatprep.subr.mxu0 0.0
    %122 = vmatpush2.msra.mxu0 0.0
    %123 = vmatprep.subr.mxu0 0.0
    %124 = vmatpush2.msra.mxu0 0.0
    %125 = vmatprep.mubr.f32.mxu0 0.0
    %126 = vmatmul.mubr.f32.gmra.mxu0 %v59
    %v127 = vpop.f32.mrf.mxu0
    %v128 = vadd.f32 %v55, %v127
    %v129 = vpop.f32.mrf.mxu0
    %130 = vdwg.mxu0
    %v131 = vmax.f32 %v128, 0.0
    %v132 = vld [vmem:[%s3] sm:$0xff]
    %v133 = vld [vmem:[%s3 + $0x8] sm:$0xff]
    %v134 = vld [vmem:[%s3 + $0x10] sm:$0xff]
    %v135 = vld [vmem:[%s3 + $0x18] sm:$0xff]
    %v136 = vld [vmem:[%s4] sm:$0x1]
    %v138 = vlaneseq
    %v139 = vshrl.u32 %v138, 7
    %v140 = vsub.s32 0, %v139
    %v141 = vrot.slane %v136, %v140
    %v144 = vsel %vm57, %v131, 0
    %146 = vmatprep.subr.mxu0 0.0
    %147 = vmatpush1.msra.mxu0 0.0
    %148 = vmatprep.subr.mxu0 0.0
    %149 = vmatpush1.msra.mxu0 0.0
    %150 = vmatprep.subr.mxu0 0.0
    %151 = vmatpush1.msra.mxu0 0.0
    %152 = vmatprep.subr.mxu0 0.0
    %153 = vmatpush1.msra.mxu0 0.0
    %154 = vmatprep.subr.mxu0 0.0
    %155 = vmatpush1.msra.mxu0 0.0
    %156 = vmatprep.subr.mxu0 0.0
    %157 = vmatpush1.msra.mxu0 0.0
    %158 = vmatprep.subr.mxu0 0.0
    %159 = vmatpush1.msra.mxu0 0.0
    %160 = vmatprep.subr.mxu0 0.0
    %161 = vmatpush1.msra.mxu0 0.0
    %162 = vmatprep.subr.mxu0 0.0
    %163 = vmatpush1.msra.mxu0 0.0
    %164 = vmatprep.subr.mxu0 0.0
    %165 = vmatpush1.msra.mxu0 0.0
    %166 = vmatprep.subr.mxu0 0.0
    %167 = vmatpush1.msra.mxu0 0.0
    %168 = vmatprep.subr.mxu0 0.0
    %169 = vmatpush1.msra.mxu0 0.0
    %170 = vmatprep.subr.mxu0 0.0
    %171 = vmatpush1.msra.mxu0 %v135
    %172 = vmatprep.subr.mxu0 0.0
    %173 = vmatpush1.msra.mxu0 %v134
    %174 = vmatprep.subr.mxu0 0.0
    %175 = vmatpush1.msra.mxu0 %v133
    %176 = vmatprep.subr.mxu0 0.0
    %177 = vmatpush1.msra.mxu0 %v132
    %178 = vmatprep.subr.mxu0 0.0
    %179 = vmatpush2.msra.mxu0 0.0
    %180 = vmatprep.subr.mxu0 0.0
    %181 = vmatpush2.msra.mxu0 0.0
    %182 = vmatprep.subr.mxu0 0.0
    %183 = vmatpush2.msra.mxu0 0.0
    %184 = vmatprep.subr.mxu0 0.0
    %185 = vmatpush2.msra.mxu0 0.0
    %186 = vmatprep.subr.mxu0 0.0
    %187 = vmatpush2.msra.mxu0 0.0
    %188 = vmatprep.subr.mxu0 0.0
    %189 = vmatpush2.msra.mxu0 0.0
    %190 = vmatprep.subr.mxu0 0.0
    %191 = vmatpush2.msra.mxu0 0.0
    %192 = vmatprep.subr.mxu0 0.0
    %193 = vmatpush2.msra.mxu0 0.0
    %194 = vmatprep.subr.mxu0 0.0
    %195 = vmatpush2.msra.mxu0 0.0
    %196 = vmatprep.subr.mxu0 0.0
    %197 = vmatpush2.msra.mxu0 0.0
    %198 = vmatprep.subr.mxu0 0.0
    %199 = vmatpush2.msra.mxu0 0.0
    %200 = vmatprep.subr.mxu0 0.0
    %201 = vmatpush2.msra.mxu0 0.0
    %202 = vmatprep.subr.mxu0 0.0
    %203 = vmatpush2.msra.mxu0 0.0
    %204 = vmatprep.subr.mxu0 0.0
    %205 = vmatpush2.msra.mxu0 0.0
    %206 = vmatprep.subr.mxu0 0.0
    %207 = vmatpush2.msra.mxu0 0.0
    %208 = vmatprep.subr.mxu0 0.0
    %209 = vmatpush2.msra.mxu0 0.0
    %210 = vmatprep.mubr.f32.mxu0 0.0
    %211 = vmatmul.mubr.f32.gmra.mxu0 %v144
    %v212 = vpop.f32.mrf.mxu0
    %v213 = vadd.f32 %v141, %v212
    %v214 = vpop.f32.mrf.mxu0
    %215 = vdwg.mxu0
    %v216 = vmax.f32 %v213, 0.0
    %v217 = vld [vmem:[%s5] sm:$0xff]
    %v218 = vld [vmem:[%s5 + $0x8] sm:$0xff]
    %v219 = vld [vmem:[%s5 + $0x10] sm:$0xff]
    %v220 = vld [vmem:[%s5 + $0x18] sm:$0xff]
    %v221 = vld [vmem:[%s5 + $0x20] sm:$0xff]
    %v222 = vld [vmem:[%s5 + $0x28] sm:$0xff]
    %v223 = vld [vmem:[%s5 + $0x30] sm:$0xff]
    %v224 = vld [vmem:[%s5 + $0x38] sm:$0xff]
    %v225 = vld [vmem:[%s6] sm:$0x1]
    %v227 = vlaneseq
    %v228 = vshrl.u32 %v227, 7
    %v229 = vsub.s32 0, %v228
    %v230 = vrot.slane %v225, %v229
    %vm232 = vcmask 523264
    %v234 = vsel %vm232, %v216, 0
    %236 = vmatprep.subr.mxu0 0.0
    %237 = vmatpush1.msra.mxu0 0.0
    %238 = vmatprep.subr.mxu0 0.0
    %239 = vmatpush1.msra.mxu0 0.0
    %240 = vmatprep.subr.mxu0 0.0
    %241 = vmatpush1.msra.mxu0 0.0
    %242 = vmatprep.subr.mxu0 0.0
    %243 = vmatpush1.msra.mxu0 0.0
    %244 = vmatprep.subr.mxu0 0.0
    %245 = vmatpush1.msra.mxu0 0.0
    %246 = vmatprep.subr.mxu0 0.0
    %247 = vmatpush1.msra.mxu0 0.0
    %248 = vmatprep.subr.mxu0 0.0
    %249 = vmatpush1.msra.mxu0 0.0
    %250 = vmatprep.subr.mxu0 0.0
    %251 = vmatpush1.msra.mxu0 0.0
    %252 = vmatprep.subr.mxu0 0.0
    %253 = vmatpush1.msra.mxu0 %v224
    %254 = vmatprep.subr.mxu0 0.0
    %255 = vmatpush1.msra.mxu0 %v223
    %256 = vmatprep.subr.mxu0 0.0
    %257 = vmatpush1.msra.mxu0 %v222
    %258 = vmatprep.subr.mxu0 0.0
    %259 = vmatpush1.msra.mxu0 %v221
    %260 = vmatprep.subr.mxu0 0.0
    %261 = vmatpush1.msra.mxu0 %v220
    %262 = vmatprep.subr.mxu0 0.0
    %263 = vmatpush1.msra.mxu0 %v219
    %264 = vmatprep.subr.mxu0 0.0
    %265 = vmatpush1.msra.mxu0 %v218
    %266 = vmatprep.subr.mxu0 0.0
    %267 = vmatpush1.msra.mxu0 %v217
    %268 = vmatprep.subr.mxu0 0.0
    %269 = vmatpush2.msra.mxu0 0.0
    %270 = vmatprep.subr.mxu0 0.0
    %271 = vmatpush2.msra.mxu0 0.0
    %272 = vmatprep.subr.mxu0 0.0
    %273 = vmatpush2.msra.mxu0 0.0
    %274 = vmatprep.subr.mxu0 0.0
    %275 = vmatpush2.msra.mxu0 0.0
    %276 = vmatprep.subr.mxu0 0.0
    %277 = vmatpush2.msra.mxu0 0.0
    %278 = vmatprep.subr.mxu0 0.0
    %279 = vmatpush2.msra.mxu0 0.0
    %280 = vmatprep.subr.mxu0 0.0
    %281 = vmatpush2.msra.mxu0 0.0
    %282 = vmatprep.subr.mxu0 0.0
    %283 = vmatpush2.msra.mxu0 0.0
    %284 = vmatprep.subr.mxu0 0.0
    %285 = vmatpush2.msra.mxu0 0.0
    %286 = vmatprep.subr.mxu0 0.0
    %287 = vmatpush2.msra.mxu0 0.0
    %288 = vmatprep.subr.mxu0 0.0
    %289 = vmatpush2.msra.mxu0 0.0
    %290 = vmatprep.subr.mxu0 0.0
    %291 = vmatpush2.msra.mxu0 0.0
    %292 = vmatprep.subr.mxu0 0.0
    %293 = vmatpush2.msra.mxu0 0.0
    %294 = vmatprep.subr.mxu0 0.0
    %295 = vmatpush2.msra.mxu0 0.0
    %296 = vmatprep.subr.mxu0 0.0
    %297 = vmatpush2.msra.mxu0 0.0
    %298 = vmatprep.subr.mxu0 0.0
    %299 = vmatpush2.msra.mxu0 0.0
    %300 = vmatprep.mubr.f32.mxu0 0.0
    %301 = vmatmul.mubr.f32.gmra.mxu0 %v234
    %v302 = vpop.f32.mrf.mxu0
    %v303 = vadd.f32 %v230, %v302
    %v304 = vpop.f32.mrf.mxu0
    %305 = vdwg.mxu0
    %v306 = vmax.f32 %v303, 0.0
    %v307 = vld [vmem:[%s7] sm:$0xff]
    %v308 = vld [vmem:[%s7 + $0x8] sm:$0xff]
    %v309 = vld [vmem:[%s7 + $0x10] sm:$0xff]
    %v310 = vld [vmem:[%s7 + $0x18] sm:$0xff]
    %v311 = vld [vmem:[%s8] sm:$0x1]
    %v313 = vlaneseq
    %v314 = vshrl.u32 %v313, 7
    %v315 = vsub.s32 0, %v314
    %v316 = vrot.slane %v311, %v315
    %v319 = vsel %vm57, %v306, 0
    %321 = vmatprep.subr.mxu0 0.0
    %322 = vmatpush1.msra.mxu0 0.0
    %323 = vmatprep.subr.mxu0 0.0
    %324 = vmatpush1.msra.mxu0 0.0
    %325 = vmatprep.subr.mxu0 0.0
    %326 = vmatpush1.msra.mxu0 0.0
    %327 = vmatprep.subr.mxu0 0.0
    %328 = vmatpush1.msra.mxu0 0.0
    %329 = vmatprep.subr.mxu0 0.0
    %330 = vmatpush1.msra.mxu0 0.0
    %331 = vmatprep.subr.mxu0 0.0
    %332 = vmatpush1.msra.mxu0 0.0
    %333 = vmatprep.subr.mxu0 0.0
    %334 = vmatpush1.msra.mxu0 0.0
    %335 = vmatprep.subr.mxu0 0.0
    %336 = vmatpush1.msra.mxu0 0.0
    %337 = vmatprep.subr.mxu0 0.0
    %338 = vmatpush1.msra.mxu0 0.0
    %339 = vmatprep.subr.mxu0 0.0
    %340 = vmatpush1.msra.mxu0 0.0
    %341 = vmatprep.subr.mxu0 0.0
    %342 = vmatpush1.msra.mxu0 0.0
    %343 = vmatprep.subr.mxu0 0.0
    %344 = vmatpush1.msra.mxu0 0.0
    %345 = vmatprep.subr.mxu0 0.0
    %346 = vmatpush1.msra.mxu0 %v310
    %347 = vmatprep.subr.mxu0 0.0
    %348 = vmatpush1.msra.mxu0 %v309
    %349 = vmatprep.subr.mxu0 0.0
    %350 = vmatpush1.msra.mxu0 %v308
    %351 = vmatprep.subr.mxu0 0.0
    %352 = vmatpush1.msra.mxu0 %v307
    %353 = vmatprep.subr.mxu0 0.0
    %354 = vmatpush2.msra.mxu0 0.0
    %355 = vmatprep.subr.mxu0 0.0
    %356 = vmatpush2.msra.mxu0 0.0
    %357 = vmatprep.subr.mxu0 0.0
    %358 = vmatpush2.msra.mxu0 0.0
    %359 = vmatprep.subr.mxu0 0.0
    %360 = vmatpush2.msra.mxu0 0.0
    %361 = vmatprep.subr.mxu0 0.0
    %362 = vmatpush2.msra.mxu0 0.0
    %363 = vmatprep.subr.mxu0 0.0
    %364 = vmatpush2.msra.mxu0 0.0
    %365 = vmatprep.subr.mxu0 0.0
    %366 = vmatpush2.msra.mxu0 0.0
    %367 = vmatprep.subr.mxu0 0.0
    %368 = vmatpush2.msra.mxu0 0.0
    %369 = vmatprep.subr.mxu0 0.0
    %370 = vmatpush2.msra.mxu0 0.0
    %371 = vmatprep.subr.mxu0 0.0
    %372 = vmatpush2.msra.mxu0 0.0
    %373 = vmatprep.subr.mxu0 0.0
    %374 = vmatpush2.msra.mxu0 0.0
    %375 = vmatprep.subr.mxu0 0.0
    %376 = vmatpush2.msra.mxu0 0.0
    %377 = vmatprep.subr.mxu0 0.0
    %378 = vmatpush2.msra.mxu0 0.0
    %379 = vmatprep.subr.mxu0 0.0
    %380 = vmatpush2.msra.mxu0 0.0
    %381 = vmatprep.subr.mxu0 0.0
    %382 = vmatpush2.msra.mxu0 0.0
    %383 = vmatprep.subr.mxu0 0.0
    %384 = vmatpush2.msra.mxu0 0.0
    %385 = vmatprep.mubr.f32.mxu0 0.0
    %386 = vmatmul.mubr.f32.gmra.mxu0 %v319
    %v387 = vpop.f32.mrf.mxu0
    %v388 = vadd.f32 %v316, %v387
    %v389 = vpop.f32.mrf.mxu0
    %390 = vdwg.mxu0
    %391 = vst [vmem:[#allocation5] sm:$0xff] %v388
    // Predicated region
    $region42: #{tpu_custom_call.1} parent=1 // pred_check
      _
    $region43: #{tpu_custom_call.1} parent=1 // pred_check_branch
      %393 = sbr.rel (0) target = $region45
    $region44: #{tpu_custom_call.1} parent=1 // pred_region
      %s395 = ssub.s32 128, 128
      %396 = vsyncadd [#allocation4], %s395
      %s398 = sshll.u32 [#allocation5], 4
      %s399 = int_to_ptr.vmem [resolvable:$true] %s398
      %401 = dma.vmem_to_hbm [thread:$0]  %s399, 128, %s9, [#allocation4]
    $region45: #{tpu_custom_call.1} parent=1 // pred_fallthru
      _
    // Predicated region
    $region46: #{tpu_custom_call.1} parent=1 // pred_check
      _
    $region47: #{tpu_custom_call.1} parent=1 // pred_check_branch
      %403 = sbr.rel (0) target = $region49
    $region48: #{tpu_custom_call.1} parent=1 // pred_region
      %404 = dma.done [#allocation4], 128
    $region49: #{tpu_custom_call.1} parent=1 // pred_fallthru
      _
    %405 = vsyncpa [#allocation3], 1
    %406 = vsyncpa [#allocation4], 1

</llo_original>
